<compile_context>
chip_gen: v6e
topology: v6e:2x2x1
jax: 0.10.0
libtpu: 0.0.40
codegen_flags: <defaults>
</compile_context>

<pallas_src>
import jax
import jax.numpy as jnp
from jax.experimental import pallas as pl
from jax.experimental.pallas import tpu as pltpu


def _round_up(v, m):
    return (v + m - 1) // m * m


_MIB = 1024 * 1024


def _vmem_limit(estimate_bytes):
    # Raise above the scoped defaults (16 MiB v5e / 32 MiB v6e,v7x) when the
    # working set needs it, but stay safely below v7x's 64 MiB physical VMEM.
    return int(min(56 * _MIB, max(16 * _MIB, 2 * estimate_bytes)))


# ----------------------------------------------------------------------------
# Kernel A: node embedding + fused per-graph sum pooling
#   node_emb = relu(x @ W_enc + b_enc)            (per node-row tile)
#   z_sum[g] += sum_{n in tile, batch[n]==g} node_emb[n]
# Pooling is a bf16 mask matmul on the MXU (no scatter); z_sum is a resident
# accumulator output (constant index along the node-tile axis).
# ----------------------------------------------------------------------------
def _encode_pool_kernel(batch_ref, x_ref, w_ref, b_ref, nemb_ref, zsum_ref):
    @pl.when(pl.program_id(0) == 0)
    def _():
        zsum_ref[...] = jnp.zeros_like(zsum_ref)

    # bf16 MXU operands (x pre-cast in the wrapper pad), f32 accumulation,
    # bias + ReLU in f32 on the VPU.
    h = jnp.dot(x_ref[...], w_ref[...], preferred_element_type=jnp.float32)
    nemb = jnp.maximum(h + b_ref[...], 0.0)                 # [tile_n, d_pad] f32
    nemb_ref[...] = nemb.astype(nemb_ref.dtype)

    # Membership mask [g_pad, tile_n], built directly in bf16 ({0,1} exact).
    # Padded node slots carry batch id -1 and never match any graph row.
    g_pad = zsum_ref.shape[0]
    tile_n = x_ref.shape[0]
    graph_ids = jax.lax.broadcasted_iota(jnp.int32, (g_pad, tile_n), 0)
    mask = (batch_ref[...] == graph_ids).astype(jnp.bfloat16)

    zsum_ref[...] += jnp.dot(mask, nemb.astype(jnp.bfloat16),
                             preferred_element_type=jnp.float32)


def encode_and_pool(batch_row, x_pad, w_enc_bf16, b_enc, *, g_pad, tile_n):
    n_pad, f_pad = x_pad.shape
    d_pad = w_enc_bf16.shape[1]
    est = (2 * (tile_n * f_pad * 2 + tile_n * d_pad * 4)   # pipelined x / node_emb tiles
           + 2 * f_pad * d_pad * 2                          # resident W_enc (double-buffered)
           + g_pad * d_pad * 4                              # z_sum accumulator
           + 4 * d_pad + 4 * g_pad * tile_n)                # bias + mask temporaries
    return pl.pallas_call(
        _encode_pool_kernel,
        out_shape=(jax.ShapeDtypeStruct((n_pad, d_pad), jnp.float32),
                   jax.ShapeDtypeStruct((g_pad, d_pad), jnp.float32)),
        grid=(n_pad // tile_n,),
        in_specs=[
            pl.BlockSpec((1, tile_n), lambda i: (0, i)),     # batch ids (node tile)
            pl.BlockSpec((tile_n, f_pad), lambda i: (i, 0)), # x tile (bf16)
            pl.BlockSpec((f_pad, d_pad), lambda i: (0, 0)),  # W_enc resident
            pl.BlockSpec((1, d_pad), lambda i: (0, 0)),      # b_enc resident
        ],
        out_specs=(
            pl.BlockSpec((tile_n, d_pad), lambda i: (i, 0)), # node_emb tile
            pl.BlockSpec((g_pad, d_pad), lambda i: (0, 0)),  # z_sum accumulator (resident)
        ),
        compiler_params=pltpu.CompilerParams(
            dimension_semantics=("arbitrary",),              # z_sum reduces over node tiles
            vmem_limit_bytes=_vmem_limit(est)),
    )(batch_row, x_pad, w_enc_bf16, b_enc)


# ----------------------------------------------------------------------------
# Kernel B: mean normalization + projection head (tiny, per graph tile)
#   z = z_sum / count;  out = relu(z @ W1 + b1) @ W2 + b2
# ----------------------------------------------------------------------------
def _proj_head_kernel(zsum_ref, cnt_ref, w1_ref, b1_ref, w2_ref, b2_ref, o_ref):
    # 1/count on the EUP slot (otherwise idle here) -- essentially free.
    inv = pl.reciprocal(jnp.maximum(cnt_ref[...], 1.0), approx=True)  # [tg, 1]
    z = zsum_ref[...] * inv                                           # mean pool, f32

    h = jnp.dot(z.astype(jnp.bfloat16), w1_ref[...],
                preferred_element_type=jnp.float32) + b1_ref[...]
    h = jnp.maximum(h, 0.0)
    o = jnp.dot(h.astype(jnp.bfloat16), w2_ref[...],
                preferred_element_type=jnp.float32) + b2_ref[...]
    o_ref[...] = o.astype(o_ref.dtype)


def project(z_sum, counts, w1_bf16, b1, w2_bf16, b2, *, tile_g):
    g_pad, d_pad = z_sum.shape
    h_pad = w1_bf16.shape[1]
    est = (2 * (tile_g * d_pad * 4 + tile_g * 4 + tile_g * h_pad * 4)
           + 2 * (d_pad * h_pad + h_pad * h_pad) * 2 + 8 * h_pad)
    return pl.pallas_call(
        _proj_head_kernel,
        out_shape=jax.ShapeDtypeStruct((g_pad, h_pad), jnp.float32),
        grid=(g_pad // tile_g,),
        in_specs=[
            pl.BlockSpec((tile_g, d_pad), lambda i: (i, 0)),  # z_sum tile
            pl.BlockSpec((tile_g, 1), lambda i: (i, 0)),      # per-graph counts
            pl.BlockSpec((d_pad, h_pad), lambda i: (0, 0)),   # W1 resident
            pl.BlockSpec((1, h_pad), lambda i: (0, 0)),       # b1 resident
            pl.BlockSpec((h_pad, h_pad), lambda i: (0, 0)),   # W2 resident
            pl.BlockSpec((1, h_pad), lambda i: (0, 0)),       # b2 resident
        ],
        out_specs=pl.BlockSpec((tile_g, h_pad), lambda i: (i, 0)),
        compiler_params=pltpu.CompilerParams(
            dimension_semantics=("parallel",),                # shardable on v7x's 2 TCs
            vmem_limit_bytes=_vmem_limit(est)),
    )(z_sum, counts, w1_bf16, b1, w2_bf16, b2)


# ----------------------------------------------------------------------------
# One-time parameter prep: pad lane/contraction dims to 128 and cast weights
# to bf16 (hoisted out of the per-call forward path).
# ----------------------------------------------------------------------------
def prepare_params(params):
    f_in, d = params["w_enc"].shape
    h = params["w1"].shape[1]
    f_pad, d_pad, h_pad = (_round_up(v, 128) for v in (f_in, d, h))

    def pad2(a, r, c, dtype):
        return jnp.zeros((r, c), dtype).at[:a.shape[0], :a.shape[1]].set(
            a.astype(dtype))

    return {
        "w_enc": pad2(params["w_enc"], f_pad, d_pad, jnp.bfloat16),
        "b_enc": pad2(params["b_enc"], 1, d_pad, jnp.float32),
        "w1": pad2(params["w1"], d_pad, h_pad, jnp.bfloat16),
        "b1": pad2(params["b1"], 1, h_pad, jnp.float32),
        "w2": pad2(params["w2"], h_pad, h_pad, jnp.bfloat16),
        "b2": pad2(params["b2"], 1, h_pad, jnp.float32),
    }


def xavier_uniform(key, fan_in, fan_out, dtype=jnp.float32):
    limit = (6.0 / (fan_in + fan_out)) ** 0.5
    return jax.random.uniform(key, (fan_in, fan_out), dtype,
                              minval=-limit, maxval=limit)


# ----------------------------------------------------------------------------
# GInfoMinMax.forward
# ----------------------------------------------------------------------------
def ginfominmax_forward(prepped, batch, x, num_graphs, out_dims,
                        edge_index=None, edge_attr=None, edge_weight=None):
    # TODO(synk): the real encoder is an injected external GNN consuming
    # edge_index/edge_attr; a node-Linear+ReLU + per-graph mean-pool surrogate
    # stands in for it here.
    d, h = out_dims
    n = x.shape[0]
    f_pad, d_pad = prepped["w_enc"].shape
    h_pad = prepped["w1"].shape[1]

    # Big node tiles for the memory-bound Kernel A; 512 is safe on v7x's
    # 64 MiB VMEM (v5e/v6e could go to 1024).
    tile_n = max(128, min(512, _round_up(n, 128)))
    n_pad = _round_up(n, tile_n)
    # >= 2 graph tiles once G > 64 so v7x can megacore-shard Kernel B.
    tile_g = min(64, _round_up(num_graphs, 8))
    g_pad = _round_up(num_graphs, tile_g)

    # Pad x and cast to bf16 in the same copy (halves Kernel A's HBM read).
    x_pad = jnp.zeros((n_pad, f_pad), jnp.bfloat16).at[:n, :x.shape[1]].set(
        x.astype(jnp.bfloat16))
    batch32 = batch.astype(jnp.int32)
    # Padded node slots get batch id -1 so they never contribute to any pool.
    batch_row = jnp.full((1, n_pad), -1, jnp.int32).at[0, :n].set(batch32)
    # Tiny O(N) per-graph node counts; normalization happens inside Kernel B.
    counts = jnp.zeros((g_pad, 1), jnp.float32).at[batch32, 0].add(1.0)

    node_emb_pad, z_sum = encode_and_pool(
        batch_row, x_pad, prepped["w_enc"], prepped["b_enc"],
        g_pad=g_pad, tile_n=tile_n)
    out_pad = project(z_sum, counts, prepped["w1"], prepped["b1"],
                      prepped["w2"], prepped["b2"], tile_g=tile_g)
    return out_pad[:num_graphs, :h], node_emb_pad[:n, :d]


if __name__ == "__main__":
    key = jax.random.PRNGKey(0)
    k_x, k_enc, k_w1, k_w2 = jax.random.split(key, 4)

    # Small synthetic graph batch: 16 nodes, 16 node features, 4 graphs.
    N, F_in = 16, 16
    D_graph = 32          # encoder.out_graph_dim == input_proj_dim
    H = 64                # proj_hidden_dim (small stand-in for 300)
    G = 4                 # number of graphs in the batch

    x = jax.random.normal(k_x, (N, F_in), dtype=jnp.float32)
    batch = jnp.repeat(jnp.arange(G, dtype=jnp.int32), N // G)   # [N]

    params = {
        "w_enc": xavier_uniform(k_enc, F_in, D_graph),
        "b_enc": jnp.zeros((1, D_graph), jnp.float32),
        "w1": xavier_uniform(k_w1, D_graph, H),
        "b1": jnp.zeros((1, H), jnp.float32),
        "w2": xavier_uniform(k_w2, H, H),
        "b2": jnp.zeros((1, H), jnp.float32),
    }

    prepped = prepare_params(params)          # one-time pad + bf16 cast
    fwd = jax.jit(ginfominmax_forward, static_argnums=(3, 4))
    z, node_emb = fwd(prepped, batch, x, G, (D_graph, H))
    jax.block_until_ready((z, node_emb))

    # Plain-JAX f32 reference (mean pool expressed with a membership matrix).
    node_ref = jnp.maximum(x @ params["w_enc"] + params["b_enc"], 0.0)
    onehot = (batch[None, :] == jnp.arange(G)[:, None]).astype(jnp.float32)
    cnt = onehot.sum(-1, keepdims=True)
    z_pool = (onehot @ node_ref) / jnp.maximum(cnt, 1.0)
    ref = (jnp.maximum(z_pool @ params["w1"] + params["b1"], 0.0)
           @ params["w2"] + params["b2"])

    assert z.shape == (G, H) and node_emb.shape == (N, D_graph)
    # bf16 MXU operands -> loosened tolerance vs the pure-f32 reference.
    assert jnp.allclose(node_emb, node_ref, atol=3e-2, rtol=3e-2)
    assert jnp.allclose(z, ref, atol=5e-2, rtol=5e-2)

    print("KERNEL_OK")
</pallas_src>

<mosaic_0001>
module attributes {stable_mosaic.version = 11 : i64} {
  func.func private @main(%arg0: i32) attributes {dimension_semantics = [#tpu.dimension_semantics<core_parallel>], iteration_bounds = array<i64: 2>, tpu.core_type = #tpu.core_type<sc_scalar_subcore>, window_params = []} {
    return
  }
}

module attributes {stable_mosaic.version = 11 : i64} {
  func.func private @main(%arg0: i32) attributes {dimension_semantics = [#tpu.dimension_semantics<core_parallel>], iteration_bounds = array<i64: 2>, tpu.core_type = #tpu.core_type<sc_scalar_subcore>, window_params = []} {
    return
  }
}

module attributes {stable_mosaic.version = 11 : i64} {
  func.func @_proj_head_kernel(%arg0: i32, %arg1: memref<8x128xf32, #tpu.memory_space<vmem>>, %arg2: memref<8x1xf32, #tpu.memory_space<vmem>>, %arg3: memref<128x128xbf16, #tpu.memory_space<vmem>>, %arg4: memref<1x128xf32, #tpu.memory_space<vmem>>, %arg5: memref<128x128xbf16, #tpu.memory_space<vmem>>, %arg6: memref<1x128xf32, #tpu.memory_space<vmem>>, %arg7: memref<8x128xf32, #tpu.memory_space<vmem>>) attributes {dimension_semantics = [#tpu.dimension_semantics<parallel>], iteration_bounds = array<i64: 1>, scalar_prefetch = 0 : i64, scratch_operands = 0 : i64, tpu.core_type = #tpu.core_type<tc>, window_params = [{transform_indices = @transform_0, window_bounds = array<i64: 8, 128>}, {transform_indices = @transform_1, window_bounds = array<i64: 8, 1>}, {pipeline_mode = #tpu.pipeline_mode<synchronous>, transform_indices = @transform_2, window_bounds = array<i64: 128, 128>}, {pipeline_mode = #tpu.pipeline_mode<synchronous>, transform_indices = @transform_3, window_bounds = array<i64: 1, 128>}, {pipeline_mode = #tpu.pipeline_mode<synchronous>, transform_indices = @transform_4, window_bounds = array<i64: 128, 128>}, {pipeline_mode = #tpu.pipeline_mode<synchronous>, transform_indices = @transform_5, window_bounds = array<i64: 1, 128>}, {transform_indices = @transform_6, window_bounds = array<i64: 8, 128>}]} {
    %c0 = arith.constant 0 : index
    %c0_0 = arith.constant 0 : index
    %0 = vector.load %arg2[%c0, %c0_0] : memref<8x1xf32, #tpu.memory_space<vmem>>, vector<8x1xf32>
    %cst = arith.constant 1.000000e+00 : f32
    %1 = vector.broadcast %cst : f32 to vector<8x1xf32>
    %2 = arith.maximumf %0, %1 : vector<8x1xf32>
    %3 = tpu.reciprocal %2 {approx = true} : vector<8x1xf32> -> vector<8x1xf32>
    %c0_1 = arith.constant 0 : index
    %c0_2 = arith.constant 0 : index
    %4 = vector.load %arg1[%c0_1, %c0_2] : memref<8x128xf32, #tpu.memory_space<vmem>>, vector<8x128xf32>
    %5 = vector.broadcast %3 : vector<8x1xf32> to vector<8x128xf32>
    %6 = arith.mulf %4, %5 : vector<8x128xf32>
    %7 = arith.truncf %6 : vector<8x128xf32> to vector<8x128xbf16>
    %c0_3 = arith.constant 0 : index
    %c0_4 = arith.constant 0 : index
    %8 = vector.load %arg3[%c0_3, %c0_4] : memref<128x128xbf16, #tpu.memory_space<vmem>>, vector<128x128xbf16>
    %cst_5 = arith.constant dense<0.000000e+00> : vector<8x128xf32>
    %9 = tpu.matmul %7, %8, %cst_5 {dimension_numbers = #tpu.dot_dimension_numbers<[1], [0], [0], [1], [0, 0, 1, 1], [], []>} : vector<8x128xbf16>, vector<128x128xbf16>, vector<8x128xf32> -> vector<8x128xf32>
    %c0_6 = arith.constant 0 : index
    %c0_7 = arith.constant 0 : index
    %10 = vector.load %arg4[%c0_6, %c0_7] : memref<1x128xf32, #tpu.memory_space<vmem>>, vector<1x128xf32>
    %11 = vector.broadcast %10 : vector<1x128xf32> to vector<8x128xf32>
    %12 = arith.addf %9, %11 : vector<8x128xf32>
    %cst_8 = arith.constant 0.000000e+00 : f32
    %13 = vector.broadcast %cst_8 : f32 to vector<8x128xf32>
    %14 = arith.maximumf %12, %13 : vector<8x128xf32>
    %15 = arith.truncf %14 : vector<8x128xf32> to vector<8x128xbf16>
    %c0_9 = arith.constant 0 : index
    %c0_10 = arith.constant 0 : index
    %16 = vector.load %arg5[%c0_9, %c0_10] : memref<128x128xbf16, #tpu.memory_space<vmem>>, vector<128x128xbf16>
    %cst_11 = arith.constant dense<0.000000e+00> : vector<8x128xf32>
    %17 = tpu.matmul %15, %16, %cst_11 {dimension_numbers = #tpu.dot_dimension_numbers<[1], [0], [0], [1], [0, 0, 1, 1], [], []>} : vector<8x128xbf16>, vector<128x128xbf16>, vector<8x128xf32> -> vector<8x128xf32>
    %c0_12 = arith.constant 0 : index
    %c0_13 = arith.constant 0 : index
    %18 = vector.load %arg6[%c0_12, %c0_13] : memref<1x128xf32, #tpu.memory_space<vmem>>, vector<1x128xf32>
    %19 = vector.broadcast %18 : vector<1x128xf32> to vector<8x128xf32>
    %20 = arith.addf %17, %19 : vector<8x128xf32>
    %c0_14 = arith.constant 0 : index
    %c0_15 = arith.constant 0 : index
    %21 = vector.load %arg7[%c0_14, %c0_15] : memref<8x128xf32, #tpu.memory_space<vmem>>, vector<8x128xf32>
    tpu.vector_store %arg7[%c0_14, %c0_15], %20 {strides = array<i32>} : memref<8x128xf32, #tpu.memory_space<vmem>>, vector<8x128xf32>,
    return
  }
  func.func @transform_0(%arg0: i32) -> (i32, i32) {
    %c0_i32 = arith.constant 0 : i32
    %c0_i32_0 = arith.constant 0 : i32
    return %arg0, %c0_i32 : i32, i32
  }
  func.func @transform_1(%arg0: i32) -> (i32, i32) {
    %c0_i32 = arith.constant 0 : i32
    %c0_i32_0 = arith.constant 0 : i32
    return %arg0, %c0_i32 : i32, i32
  }
  func.func @transform_2(%arg0: i32) -> (i32, i32) {
    %c0_i32 = arith.constant 0 : i32
    %c0_i32_0 = arith.constant 0 : i32
    %c0_i32_1 = arith.constant 0 : i32
    return %c0_i32, %c0_i32_0 : i32, i32
  }
  func.func @transform_3(%arg0: i32) -> (i32, i32) {
    %c0_i32 = arith.constant 0 : i32
    %c0_i32_0 = arith.constant 0 : i32
    %c0_i32_1 = arith.constant 0 : i32
    return %c0_i32, %c0_i32_0 : i32, i32
  }
  func.func @transform_4(%arg0: i32) -> (i32, i32) {
    %c0_i32 = arith.constant 0 : i32
    %c0_i32_0 = arith.constant 0 : i32
    %c0_i32_1 = arith.constant 0 : i32
    return %c0_i32, %c0_i32_0 : i32, i32
  }
  func.func @transform_5(%arg0: i32) -> (i32, i32) {
    %c0_i32 = arith.constant 0 : i32
    %c0_i32_0 = arith.constant 0 : i32
    %c0_i32_1 = arith.constant 0 : i32
    return %c0_i32, %c0_i32_0 : i32, i32
  }
  func.func @transform_6(%arg0: i32) -> (i32, i32) {
    %c0_i32 = arith.constant 0 : i32
    %c0_i32_0 = arith.constant 0 : i32
    return %arg0, %c0_i32 : i32, i32
  }
}

module attributes {stable_mosaic.version = 11 : i64} {
  func.func @_encode_pool_kernel(%arg0: i32, %arg1: memref<1x128xi32, #tpu.memory_space<vmem>>, %arg2: memref<128x128xbf16, #tpu.memory_space<vmem>>, %arg3: memref<128x128xbf16, #tpu.memory_space<vmem>>, %arg4: memref<1x128xf32, #tpu.memory_space<vmem>>, %arg5: memref<128x128xf32, #tpu.memory_space<vmem>>, %arg6: memref<8x128xf32, #tpu.memory_space<vmem>>) attributes {dimension_semantics = [#tpu.dimension_semantics<arbitrary>], iteration_bounds = array<i64: 1>, scalar_prefetch = 0 : i64, scratch_operands = 0 : i64, tpu.core_type = #tpu.core_type<tc>, window_params = [{transform_indices = @transform_0, window_bounds = array<i64: 1, 128>}, {transform_indices = @transform_1, window_bounds = array<i64: 128, 128>}, {pipeline_mode = #tpu.pipeline_mode<synchronous>, transform_indices = @transform_2, window_bounds = array<i64: 128, 128>}, {pipeline_mode = #tpu.pipeline_mode<synchronous>, transform_indices = @transform_3, window_bounds = array<i64: 1, 128>}, {transform_indices = @transform_4, window_bounds = array<i64: 128, 128>}, {pipeline_mode = #tpu.pipeline_mode<synchronous>, transform_indices = @transform_5, window_bounds = array<i64: 8, 128>}]} {
    %c0_i32 = arith.constant 0 : i32
    %0 = arith.cmpi eq, %arg0, %c0_i32 : i32
    %1 = arith.extui %0 : i1 to i32
    %c0_i32_0 = arith.constant 0 : i32
    %2 = arith.cmpi ne, %1, %c0_i32_0 : i32
    scf.if %2 {
      %cst_16 = arith.constant 0.000000e+00 : f32
      %24 = vector.broadcast %cst_16 : f32 to vector<8x128xf32>
      %c0_17 = arith.constant 0 : index
      %c0_18 = arith.constant 0 : index
      %25 = vector.load %arg6[%c0_17, %c0_18] : memref<8x128xf32, #tpu.memory_space<vmem>>, vector<8x128xf32>
      tpu.vector_store %arg6[%c0_17, %c0_18], %24 {strides = array<i32>} : memref<8x128xf32, #tpu.memory_space<vmem>>, vector<8x128xf32>,
    } else {
    }
    %c0 = arith.constant 0 : index
    %c0_1 = arith.constant 0 : index
    %3 = vector.load %arg2[%c0, %c0_1] : memref<128x128xbf16, #tpu.memory_space<vmem>>, vector<128x128xbf16>
    %c0_2 = arith.constant 0 : index
    %c0_3 = arith.constant 0 : index
    %4 = vector.load %arg3[%c0_2, %c0_3] : memref<128x128xbf16, #tpu.memory_space<vmem>>, vector<128x128xbf16>
    %cst = arith.constant dense<0.000000e+00> : vector<128x128xf32>
    %5 = tpu.matmul %3, %4, %cst {dimension_numbers = #tpu.dot_dimension_numbers<[1], [0], [0], [1], [0, 0, 1, 1], [], []>} : vector<128x128xbf16>, vector<128x128xbf16>, vector<128x128xf32> -> vector<128x128xf32>
    %c0_4 = arith.constant 0 : index
    %c0_5 = arith.constant 0 : index
    %6 = vector.load %arg4[%c0_4, %c0_5] : memref<1x128xf32, #tpu.memory_space<vmem>>, vector<1x128xf32>
    %7 = vector.broadcast %6 : vector<1x128xf32> to vector<128x128xf32>
    %8 = arith.addf %5, %7 : vector<128x128xf32>
    %cst_6 = arith.constant 0.000000e+00 : f32
    %9 = vector.broadcast %cst_6 : f32 to vector<128x128xf32>
    %10 = arith.maximumf %8, %9 : vector<128x128xf32>
    %c0_7 = arith.constant 0 : index
    %c0_8 = arith.constant 0 : index
    %11 = vector.load %arg5[%c0_7, %c0_8] : memref<128x128xf32, #tpu.memory_space<vmem>>, vector<128x128xf32>
    tpu.vector_store %arg5[%c0_7, %c0_8], %10 {strides = array<i32>} : memref<128x128xf32, #tpu.memory_space<vmem>>, vector<128x128xf32>,
    %12 = tpu.iota {dimensions = array<i32: 0>} : vector<8x128xi32>
    %c0_9 = arith.constant 0 : index
    %c0_10 = arith.constant 0 : index
    %13 = vector.load %arg1[%c0_9, %c0_10] : memref<1x128xi32, #tpu.memory_space<vmem>>, vector<1x128xi32>
    %14 = vector.broadcast %13 : vector<1x128xi32> to vector<8x128xi32>
    %15 = arith.cmpi eq, %14, %12 : vector<8x128xi32>
    %16 = arith.extui %15 : vector<8x128xi1> to vector<8x128xi32>
    %17 = arith.sitofp %16 : vector<8x128xi32> to vector<8x128xf32>
    %18 = arith.truncf %17 : vector<8x128xf32> to vector<8x128xbf16>
    %c0_11 = arith.constant 0 : index
    %c0_12 = arith.constant 0 : index
    %19 = vector.load %arg6[%c0_11, %c0_12] : memref<8x128xf32, #tpu.memory_space<vmem>>, vector<8x128xf32>
    %20 = arith.truncf %10 : vector<128x128xf32> to vector<128x128xbf16>
    %cst_13 = arith.constant dense<0.000000e+00> : vector<8x128xf32>
    %21 = tpu.matmul %18, %20, %cst_13 {dimension_numbers = #tpu.dot_dimension_numbers<[1], [0], [0], [1], [0, 0, 1, 1], [], []>} : vector<8x128xbf16>, vector<128x128xbf16>, vector<8x128xf32> -> vector<8x128xf32>
    %22 = arith.addf %19, %21 : vector<8x128xf32>
    %c0_14 = arith.constant 0 : index
    %c0_15 = arith.constant 0 : index
    %23 = vector.load %arg6[%c0_14, %c0_15] : memref<8x128xf32, #tpu.memory_space<vmem>>, vector<8x128xf32>
    tpu.vector_store %arg6[%c0_14, %c0_15], %22 {strides = array<i32>} : memref<8x128xf32, #tpu.memory_space<vmem>>, vector<8x128xf32>,
    return
  }
  func.func @transform_0(%arg0: i32) -> (i32, i32) {
    %c0_i32 = arith.constant 0 : i32
    %c0_i32_0 = arith.constant 0 : i32
    return %c0_i32, %arg0 : i32, i32
  }
  func.func @transform_1(%arg0: i32) -> (i32, i32) {
    %c0_i32 = arith.constant 0 : i32
    %c0_i32_0 = arith.constant 0 : i32
    return %arg0, %c0_i32 : i32, i32
  }
  func.func @transform_2(%arg0: i32) -> (i32, i32) {
    %c0_i32 = arith.constant 0 : i32
    %c0_i32_0 = arith.constant 0 : i32
    %c0_i32_1 = arith.constant 0 : i32
    return %c0_i32, %c0_i32_0 : i32, i32
  }
  func.func @transform_3(%arg0: i32) -> (i32, i32) {
    %c0_i32 = arith.constant 0 : i32
    %c0_i32_0 = arith.constant 0 : i32
    %c0_i32_1 = arith.constant 0 : i32
    return %c0_i32, %c0_i32_0 : i32, i32
  }
  func.func @transform_4(%arg0: i32) -> (i32, i32) {
    %c0_i32 = arith.constant 0 : i32
    %c0_i32_0 = arith.constant 0 : i32
    return %arg0, %c0_i32 : i32, i32
  }
  func.func @transform_5(%arg0: i32) -> (i32, i32) {
    %c0_i32 = arith.constant 0 : i32
    %c0_i32_0 = arith.constant 0 : i32
    %c0_i32_1 = arith.constant 0 : i32
    return %c0_i32, %c0_i32_0 : i32, i32
  }
}

</mosaic_0001>

<llo_original>
// kernel: ginfominmax_forward.3
$region0: #{ginfominmax_forward.3}
  #allocation0 [shape = 'u32[]', space=smem, size = 0x4, offset = 0x4, fixed_abs, tag = 'smem constant byte address 0x4 - core index']
  #allocation1 [shape = 'u32[144,128]{1,0:T(1,128)}', space=vmem, size = 0x12000, scoped, tag = 'internal scratch']
  %s0 = inlined_call_operand.vmem [shape: f32[8,128], index: 0, kind: input, shape index: {}]
  %s1 = inlined_call_operand.vmem [shape: f32[8,1], index: 1, kind: input, shape index: {}]
  %s2 = inlined_call_operand.vmem [shape: bf16[128,128], index: 2, kind: input, shape index: {}]
  %s3 = inlined_call_operand.vmem [shape: f32[1,128], index: 3, kind: input, shape index: {}]
  %s4 = inlined_call_operand.vmem [shape: bf16[128,128], index: 4, kind: input, shape index: {}]
  %s5 = inlined_call_operand.vmem [shape: f32[1,128], index: 5, kind: input, shape index: {}]
  %s6 = inlined_call_operand.vmem [shape: f32[8,128], index: 6, kind: output, shape index: {}]
  %s7 = sld [smem:[#allocation0]]
  $region34: #{ginfominmax_forward.3} parent=0
    _
  %s9 = ssub.s32 1, %s7
  %s10 = scalar_select 0, %s9, %s7
  // Predicated region
  $region2: #{ginfominmax_forward.3} parent=0 // pred_check
    _
  $region3: #{ginfominmax_forward.3} parent=0 // pred_check_branch
    %12 = sbr.rel (0) target = $region5
  $region4: #{ginfominmax_forward.3} parent=0 // pred_region
    _
  $region5: #{ginfominmax_forward.3} parent=0 // pred_fallthru
    _
  // Predicated region
  $region6: #{ginfominmax_forward.3} parent=0 // pred_check
    _
  $region7: #{ginfominmax_forward.3} parent=0 // pred_check_branch
    %14 = sbr.rel (0) target = $region9
  $region8: #{ginfominmax_forward.3} parent=0 // pred_region
    _
  $region9: #{ginfominmax_forward.3} parent=0 // pred_fallthru
    _
  // Predicated region
  $region10: #{ginfominmax_forward.3} parent=0 // pred_check
    _
  $region11: #{ginfominmax_forward.3} parent=0 // pred_check_branch
    %16 = sbr.rel (0) target = $region13
  $region12: #{ginfominmax_forward.3} parent=0 // pred_region
    _
  $region13: #{ginfominmax_forward.3} parent=0 // pred_fallthru
    _
  // Predicated region
  $region14: #{ginfominmax_forward.3} parent=0 // pred_check
    _
  $region15: #{ginfominmax_forward.3} parent=0 // pred_check_branch
    %18 = sbr.rel (0) target = $region17
  $region16: #{ginfominmax_forward.3} parent=0 // pred_region
    _
  $region17: #{ginfominmax_forward.3} parent=0 // pred_fallthru
    _
  // Predicated region
  $region18: #{ginfominmax_forward.3} parent=0 // pred_check
    _
  $region19: #{ginfominmax_forward.3} parent=0 // pred_check_branch
    %20 = sbr.rel (0) target = $region21
  $region20: #{ginfominmax_forward.3} parent=0 // pred_region
    _
  $region21: #{ginfominmax_forward.3} parent=0 // pred_fallthru
    _
  // Predicated region
  $region22: #{ginfominmax_forward.3} parent=0 // pred_check
    _
  $region23: #{ginfominmax_forward.3} parent=0 // pred_check_branch
    %22 = sbr.rel (0) target = $region25
  $region24: #{ginfominmax_forward.3} parent=0 // pred_region
    _
  $region25: #{ginfominmax_forward.3} parent=0 // pred_fallthru
    _
  %v24 = vld [vmem:[%s1] sm:$0xff]
  %v25 = vmax.f32 %v24, 1.0
  %v26 = vrcp.pop %v25
  %v27 = vld [vmem:[%s0] sm:$0xff]
  %29 = vset.pattern.permute.xlu0 0
  %30 = vperm.xlu0 %29, %v26
  %v31 = vpop.permute.xlu0 %30
  %v33 = vmul.f32 %v27, %v31
  %v34 = vpack.c.bf16 %v33, %v33
  %v35 = vld [vmem:[%s2] sm:$0xf]
  %v36 = vld [vmem:[%s2 + $0x4] sm:$0xf]
  %v37 = vld [vmem:[%s2 + $0x8] sm:$0xf]
  %v38 = vld [vmem:[%s2 + $0xc] sm:$0xf]
  %v39 = vld [vmem:[%s2 + $0x10] sm:$0xf]
  %v40 = vld [vmem:[%s2 + $0x14] sm:$0xf]
  %v41 = vld [vmem:[%s2 + $0x18] sm:$0xf]
  %v42 = vld [vmem:[%s2 + $0x1c] sm:$0xf]
  %v43 = vld [vmem:[%s2 + $0x20] sm:$0xf]
  %v44 = vld [vmem:[%s2 + $0x24] sm:$0xf]
  %v45 = vld [vmem:[%s2 + $0x28] sm:$0xf]
  %v46 = vld [vmem:[%s2 + $0x2c] sm:$0xf]
  %v47 = vld [vmem:[%s2 + $0x30] sm:$0xf]
  %v48 = vld [vmem:[%s2 + $0x34] sm:$0xf]
  %v49 = vld [vmem:[%s2 + $0x38] sm:$0xf]
  %v50 = vld [vmem:[%s2 + $0x3c] sm:$0xf]
  %v51 = vld [vmem:[%s3] sm:$0x1]
  %v53 = vlaneseq
  %v54 = vshrl.u32 %v53, 7
  %v55 = vsub.s32 0, %v54
  %v56 = vrot.slane %v51, %v55
  %v74 = vunpack.c.l.b16 %v35
  %v75 = vunpack.c.l.b16 %v36
  %v76 = vunpack.c.l.b16 %v37
  %v77 = vunpack.c.l.b16 %v38
  %v78 = vunpack.c.l.b16 %v39
  %v79 = vunpack.c.l.b16 %v40
  %v80 = vunpack.c.l.b16 %v41
  %v81 = vunpack.c.l.b16 %v42
  %v82 = vunpack.c.l.b16 %v43
  %v83 = vunpack.c.l.b16 %v44
  %v84 = vunpack.c.l.b16 %v45
  %v85 = vunpack.c.l.b16 %v46
  %v86 = vunpack.c.l.b16 %v47
  %v87 = vunpack.c.l.b16 %v48
  %v88 = vunpack.c.l.b16 %v49
  %v89 = vunpack.c.l.b16 %v50
  %v90 = vpack.c.b16 %v75, %v74
  %v91 = vpack.c.b16 %v77, %v76
  %v92 = vpack.c.b16 %v79, %v78
  %v93 = vpack.c.b16 %v81, %v80
  %v94 = vpack.c.b16 %v83, %v82
  %v95 = vpack.c.b16 %v85, %v84
  %v96 = vpack.c.b16 %v87, %v86
  %v97 = vpack.c.b16 %v89, %v88
  %106 = vmatprep.subr.bf16.mxu0 0
  %107 = vmatpush1.bf16.msra.mxu0 %v97
  %108 = vmatprep.subr.bf16.mxu0 0
  %109 = vmatpush1.bf16.msra.mxu0 %v96
  %110 = vmatprep.subr.bf16.mxu0 0
  %111 = vmatpush1.bf16.msra.mxu0 %v95
  %112 = vmatprep.subr.bf16.mxu0 0
  %113 = vmatpush1.bf16.msra.mxu0 %v94
  %114 = vmatprep.subr.bf16.mxu0 0
  %115 = vmatpush1.bf16.msra.mxu0 %v93
  %116 = vmatprep.subr.bf16.mxu0 0
  %117 = vmatpush1.bf16.msra.mxu0 %v92
  %118 = vmatprep.subr.bf16.mxu0 0
  %119 = vmatpush1.bf16.msra.mxu0 %v91
  %120 = vmatprep.subr.bf16.mxu0 0
  %121 = vmatpush1.bf16.msra.mxu0 %v90
  %122 = vmatprep.subr.bf16.mxu0 0
  %123 = vmatpush2.bf16.msra.mxu0 0
  %124 = vmatprep.subr.bf16.mxu0 0
  %125 = vmatpush2.bf16.msra.mxu0 0
  %126 = vmatprep.subr.bf16.mxu0 0
  %127 = vmatpush2.bf16.msra.mxu0 0
  %128 = vmatprep.subr.bf16.mxu0 0
  %129 = vmatpush2.bf16.msra.mxu0 0
  %130 = vmatprep.subr.bf16.mxu0 0
  %131 = vmatpush2.bf16.msra.mxu0 0
  %132 = vmatprep.subr.bf16.mxu0 0
  %133 = vmatpush2.bf16.msra.mxu0 0
  %134 = vmatprep.subr.bf16.mxu0 0
  %135 = vmatpush2.bf16.msra.mxu0 0
  %136 = vmatprep.subr.bf16.mxu0 0
  %137 = vmatpush2.bf16.msra.mxu0 0
  %138 = vmatprep.mubr.bf16.mxu0 0
  %139 = vmatmul.mubr.bf16.gmra.mxu0 %v34
  %v140 = vpop.f32.mrf.mxu0
  %v141 = vadd.f32 %v56, %v140
  %v142 = vpop.f32.mrf.mxu0
  %v143 = vpop.f32.mrf.mxu0
  %v144 = vpop.f32.mrf.mxu0
  %145 = vdwg.mxu0
  %v146 = vmax.f32 %v141, 0.0
  %v147 = vpack.c.bf16 %v146, %v146
  %v148 = vld [vmem:[%s4] sm:$0xf]
  %v149 = vld [vmem:[%s4 + $0x4] sm:$0xf]
  %v150 = vld [vmem:[%s4 + $0x8] sm:$0xf]
  %v151 = vld [vmem:[%s4 + $0xc] sm:$0xf]
  %v152 = vld [vmem:[%s4 + $0x10] sm:$0xf]
  %v153 = vld [vmem:[%s4 + $0x14] sm:$0xf]
  %v154 = vld [vmem:[%s4 + $0x18] sm:$0xf]
  %v155 = vld [vmem:[%s4 + $0x1c] sm:$0xf]
  %v156 = vld [vmem:[%s4 + $0x20] sm:$0xf]
  %v157 = vld [vmem:[%s4 + $0x24] sm:$0xf]
  %v158 = vld [vmem:[%s4 + $0x28] sm:$0xf]
  %v159 = vld [vmem:[%s4 + $0x2c] sm:$0xf]
  %v160 = vld [vmem:[%s4 + $0x30] sm:$0xf]
  %v161 = vld [vmem:[%s4 + $0x34] sm:$0xf]
  %v162 = vld [vmem:[%s4 + $0x38] sm:$0xf]
  %v163 = vld [vmem:[%s4 + $0x3c] sm:$0xf]
  %v164 = vld [vmem:[%s5] sm:$0x1]
  %v166 = vlaneseq
  %v167 = vshrl.u32 %v166, 7
  %v168 = vsub.s32 0, %v167
  %v169 = vrot.slane %v164, %v168
  %v187 = vunpack.c.l.b16 %v148
  %v188 = vunpack.c.l.b16 %v149
  %v189 = vunpack.c.l.b16 %v150
  %v190 = vunpack.c.l.b16 %v151
  %v191 = vunpack.c.l.b16 %v152
  %v192 = vunpack.c.l.b16 %v153
  %v193 = vunpack.c.l.b16 %v154
  %v194 = vunpack.c.l.b16 %v155
  %v195 = vunpack.c.l.b16 %v156
  %v196 = vunpack.c.l.b16 %v157
  %v197 = vunpack.c.l.b16 %v158
  %v198 = vunpack.c.l.b16 %v159
  %v199 = vunpack.c.l.b16 %v160
  %v200 = vunpack.c.l.b16 %v161
  %v201 = vunpack.c.l.b16 %v162
  %v202 = vunpack.c.l.b16 %v163
  %v203 = vpack.c.b16 %v188, %v187
  %v204 = vpack.c.b16 %v190, %v189
  %v205 = vpack.c.b16 %v192, %v191
  %v206 = vpack.c.b16 %v194, %v193
  %v207 = vpack.c.b16 %v196, %v195
  %v208 = vpack.c.b16 %v198, %v197
  %v209 = vpack.c.b16 %v200, %v199
  %v210 = vpack.c.b16 %v202, %v201
  %219 = vmatprep.subr.bf16.mxu0 0
  %220 = vmatpush1.bf16.msra.mxu0 %v210
  %221 = vmatprep.subr.bf16.mxu0 0
  %222 = vmatpush1.bf16.msra.mxu0 %v209
  %223 = vmatprep.subr.bf16.mxu0 0
  %224 = vmatpush1.bf16.msra.mxu0 %v208
  %225 = vmatprep.subr.bf16.mxu0 0
  %226 = vmatpush1.bf16.msra.mxu0 %v207
  %227 = vmatprep.subr.bf16.mxu0 0
  %228 = vmatpush1.bf16.msra.mxu0 %v206
  %229 = vmatprep.subr.bf16.mxu0 0
  %230 = vmatpush1.bf16.msra.mxu0 %v205
  %231 = vmatprep.subr.bf16.mxu0 0
  %232 = vmatpush1.bf16.msra.mxu0 %v204
  %233 = vmatprep.subr.bf16.mxu0 0
  %234 = vmatpush1.bf16.msra.mxu0 %v203
  %235 = vmatprep.subr.bf16.mxu0 0
  %236 = vmatpush2.bf16.msra.mxu0 0
  %237 = vmatprep.subr.bf16.mxu0 0
  %238 = vmatpush2.bf16.msra.mxu0 0
  %239 = vmatprep.subr.bf16.mxu0 0
  %240 = vmatpush2.bf16.msra.mxu0 0
  %241 = vmatprep.subr.bf16.mxu0 0
  %242 = vmatpush2.bf16.msra.mxu0 0
  %243 = vmatprep.subr.bf16.mxu0 0
  %244 = vmatpush2.bf16.msra.mxu0 0
  %245 = vmatprep.subr.bf16.mxu0 0
  %246 = vmatpush2.bf16.msra.mxu0 0
  %247 = vmatprep.subr.bf16.mxu0 0
  %248 = vmatpush2.bf16.msra.mxu0 0
  %249 = vmatprep.subr.bf16.mxu0 0
  %250 = vmatpush2.bf16.msra.mxu0 0
  %251 = vmatprep.mubr.bf16.mxu0 0
  %252 = vmatmul.mubr.bf16.gmra.mxu0 %v147
  %v253 = vpop.f32.mrf.mxu0
  %v254 = vadd.f32 %v169, %v253
  %v255 = vpop.f32.mrf.mxu0
  %v256 = vpop.f32.mrf.mxu0
  %v257 = vpop.f32.mrf.mxu0
  %258 = vdwg.mxu0
  %259 = vst [vmem:[%s6] sm:$0xff] %v254
  // Predicated region
  $region26: #{ginfominmax_forward.3} parent=0 // pred_check
    _
  $region27: #{ginfominmax_forward.3} parent=0 // pred_check_branch
    %261 = sbr.rel (0) target = $region29
  $region28: #{ginfominmax_forward.3} parent=0 // pred_region
    _
  $region29: #{ginfominmax_forward.3} parent=0 // pred_fallthru
    _
  // Predicated region
  $region30: #{ginfominmax_forward.3} parent=0 // pred_check
    _
  $region31: #{ginfominmax_forward.3} parent=0 // pred_check_branch
    %263 = sbr.rel (0) target = $region33
  $region32: #{ginfominmax_forward.3} parent=0 // pred_region
    _
  $region33: #{ginfominmax_forward.3} parent=0 // pred_fallthru
    _

// kernel: ginfominmax_forward.2
$region0: #{ginfominmax_forward.2}
  #allocation0 [shape = 'u32[]', space=smem, size = 0x4, offset = 0x4, fixed_abs, tag = 'smem constant byte address 0x4 - core index']
  #allocation1 [shape = 'u32[144,128]{1,0:T(1,128)}', space=vmem, size = 0x12000, scoped, tag = 'internal scratch']
  %s0 = inlined_call_operand.vmem [shape: s32[1,128], index: 0, kind: input, shape index: {}]
  %s1 = inlined_call_operand.vmem [shape: bf16[128,128], index: 1, kind: input, shape index: {}]
  %s2 = inlined_call_operand.vmem [shape: bf16[128,128], index: 2, kind: input, shape index: {}]
  %s3 = inlined_call_operand.vmem [shape: f32[1,128], index: 3, kind: input, shape index: {}]
  %s4 = inlined_call_operand.vmem [shape: f32[128,128], index: 4, kind: output, shape index: {0}]
  %s5 = inlined_call_operand.vmem [shape: f32[8,128], index: 5, kind: output, shape index: {1}]
  %6 = xla_tuple %s4, %s5
  %s7 = sld [smem:[#allocation0]]
  $region38: #{ginfominmax_forward.2} parent=0
    _
  %s9 = ssub.s32 1, %s7
  %s10 = scalar_select 0, %s9, %s7
  // Predicated region
  $region2: #{ginfominmax_forward.2} parent=0 // pred_check
    _
  $region3: #{ginfominmax_forward.2} parent=0 // pred_check_branch
    %12 = sbr.rel (0) target = $region5
  $region4: #{ginfominmax_forward.2} parent=0 // pred_region
    _
  $region5: #{ginfominmax_forward.2} parent=0 // pred_fallthru
    _
  // Predicated region
  $region6: #{ginfominmax_forward.2} parent=0 // pred_check
    _
  $region7: #{ginfominmax_forward.2} parent=0 // pred_check_branch
    %14 = sbr.rel (0) target = $region9
  $region8: #{ginfominmax_forward.2} parent=0 // pred_region
    _
  $region9: #{ginfominmax_forward.2} parent=0 // pred_fallthru
    _
  // Predicated region
  $region10: #{ginfominmax_forward.2} parent=0 // pred_check
    _
  $region11: #{ginfominmax_forward.2} parent=0 // pred_check_branch
    %16 = sbr.rel (0) target = $region13
  $region12: #{ginfominmax_forward.2} parent=0 // pred_region
    _
  $region13: #{ginfominmax_forward.2} parent=0 // pred_fallthru
    _
  // Predicated region
  $region14: #{ginfominmax_forward.2} parent=0 // pred_check
    _
  $region15: #{ginfominmax_forward.2} parent=0 // pred_check_branch
    %18 = sbr.rel (0) target = $region17
  $region16: #{ginfominmax_forward.2} parent=0 // pred_region
    _
  $region17: #{ginfominmax_forward.2} parent=0 // pred_fallthru
    _
  %p20 = scmp.eq.s32.totalorder 0, 0
  // Predicated region
  $region18: #{ginfominmax_forward.2} parent=0 // pred_check
    %p21 = pneg %p20
  $region19: #{ginfominmax_forward.2} parent=0 // pred_check_branch
    %23 = sbr.rel (%p21) target = $region21
  $region20: #{ginfominmax_forward.2} parent=0 // pred_region
    %24 = vst [vmem:[%s5] sm:$0xff] 0.0
  $region21: #{ginfominmax_forward.2} parent=0 // pred_fallthru
    _
  %v25 = vld [vmem:[%s1] sm:$0xf]
  %v26 = vld [vmem:[%s1 + $0x4] sm:$0xf]
  %v27 = vld [vmem:[%s1 + $0x8] sm:$0xf]
  %v28 = vld [vmem:[%s1 + $0xc] sm:$0xf]
  %v29 = vld [vmem:[%s1 + $0x10] sm:$0xf]
  %v30 = vld [vmem:[%s1 + $0x14] sm:$0xf]
  %v31 = vld [vmem:[%s1 + $0x18] sm:$0xf]
  %v32 = vld [vmem:[%s1 + $0x1c] sm:$0xf]
  %v33 = vld [vmem:[%s1 + $0x20] sm:$0xf]
  %v34 = vld [vmem:[%s1 + $0x24] sm:$0xf]
  %v35 = vld [vmem:[%s1 + $0x28] sm:$0xf]
  %v36 = vld [vmem:[%s1 + $0x2c] sm:$0xf]
  %v37 = vld [vmem:[%s1 + $0x30] sm:$0xf]
  %v38 = vld [vmem:[%s1 + $0x34] sm:$0xf]
  %v39 = vld [vmem:[%s1 + $0x38] sm:$0xf]
  %v40 = vld [vmem:[%s1 + $0x3c] sm:$0xf]
  %v41 = vld [vmem:[%s2] sm:$0xf]
  %v42 = vld [vmem:[%s2 + $0x4] sm:$0xf]
  %v43 = vld [vmem:[%s2 + $0x8] sm:$0xf]
  %v44 = vld [vmem:[%s2 + $0xc] sm:$0xf]
  %v45 = vld [vmem:[%s2 + $0x10] sm:$0xf]
  %v46 = vld [vmem:[%s2 + $0x14] sm:$0xf]
  %v47 = vld [vmem:[%s2 + $0x18] sm:$0xf]
  %v48 = vld [vmem:[%s2 + $0x1c] sm:$0xf]
  %v49 = vld [vmem:[%s2 + $0x20] sm:$0xf]
  %v50 = vld [vmem:[%s2 + $0x24] sm:$0xf]
  %v51 = vld [vmem:[%s2 + $0x28] sm:$0xf]
  %v52 = vld [vmem:[%s2 + $0x2c] sm:$0xf]
  %v53 = vld [vmem:[%s2 + $0x30] sm:$0xf]
  %v54 = vld [vmem:[%s2 + $0x34] sm:$0xf]
  %v55 = vld [vmem:[%s2 + $0x38] sm:$0xf]
  %v56 = vld [vmem:[%s2 + $0x3c] sm:$0xf]
  %v57 = vld [vmem:[%s3] sm:$0x1]
  %v59 = vlaneseq
  %v60 = vshrl.u32 %v59, 7
  %v61 = vsub.s32 0, %v60
  %v62 = vrot.slane %v57, %v61
  %v80 = vunpack.c.l.b16 %v25
  %v81 = vunpack.c.l.b16 %v26
  %v82 = vunpack.c.l.b16 %v27
  %v83 = vunpack.c.l.b16 %v28
  %v84 = vunpack.c.l.b16 %v29
  %v85 = vunpack.c.l.b16 %v30
  %v86 = vunpack.c.l.b16 %v31
  %v87 = vunpack.c.l.b16 %v32
  %v88 = vunpack.c.l.b16 %v33
  %v89 = vunpack.c.l.b16 %v34
  %v90 = vunpack.c.l.b16 %v35
  %v91 = vunpack.c.l.b16 %v36
  %v92 = vunpack.c.l.b16 %v37
  %v93 = vunpack.c.l.b16 %v38
  %v94 = vunpack.c.l.b16 %v39
  %v95 = vunpack.c.l.b16 %v40
  %v96 = vpack.c.b16 %v81, %v80
  %v97 = vpack.c.b16 %v83, %v82
  %v98 = vpack.c.b16 %v85, %v84
  %v99 = vpack.c.b16 %v87, %v86
  %v100 = vpack.c.b16 %v89, %v88
  %v101 = vpack.c.b16 %v91, %v90
  %v102 = vpack.c.b16 %v93, %v92
  %v103 = vpack.c.b16 %v95, %v94
  %v128 = vunpack.c.l.b16 %v41
  %v129 = vunpack.c.l.b16 %v42
  %v130 = vunpack.c.l.b16 %v43
  %v131 = vunpack.c.l.b16 %v44
  %v132 = vunpack.c.l.b16 %v45
  %v133 = vunpack.c.l.b16 %v46
  %v134 = vunpack.c.l.b16 %v47
  %v135 = vunpack.c.l.b16 %v48
  %v136 = vunpack.c.l.b16 %v49
  %v137 = vunpack.c.l.b16 %v50
  %v138 = vunpack.c.l.b16 %v51
  %v139 = vunpack.c.l.b16 %v52
  %v140 = vunpack.c.l.b16 %v53
  %v141 = vunpack.c.l.b16 %v54
  %v142 = vunpack.c.l.b16 %v55
  %v143 = vunpack.c.l.b16 %v56
  %v144 = vpack.c.b16 %v129, %v128
  %v145 = vpack.c.b16 %v131, %v130
  %v146 = vpack.c.b16 %v133, %v132
  %v147 = vpack.c.b16 %v135, %v134
  %v148 = vpack.c.b16 %v137, %v136
  %v149 = vpack.c.b16 %v139, %v138
  %v150 = vpack.c.b16 %v141, %v140
  %v151 = vpack.c.b16 %v143, %v142
  %160 = vmatprep.subr.bf16.mxu0 0
  %161 = vmatpush1.bf16.msra.mxu0 %v151
  %162 = vmatprep.subr.bf16.mxu0 0
  %163 = vmatpush1.bf16.msra.mxu0 %v150
  %164 = vmatprep.subr.bf16.mxu0 0
  %165 = vmatpush1.bf16.msra.mxu0 %v149
  %166 = vmatprep.subr.bf16.mxu0 0
  %167 = vmatpush1.bf16.msra.mxu0 %v148
  %168 = vmatprep.subr.bf16.mxu0 0
  %169 = vmatpush1.bf16.msra.mxu0 %v147
  %170 = vmatprep.subr.bf16.mxu0 0
  %171 = vmatpush1.bf16.msra.mxu0 %v146
  %172 = vmatprep.subr.bf16.mxu0 0
  %173 = vmatpush1.bf16.msra.mxu0 %v145
  %174 = vmatprep.subr.bf16.mxu0 0
  %175 = vmatpush1.bf16.msra.mxu0 %v144
  %176 = vmatprep.subr.bf16.mxu0 0
  %177 = vmatpush2.bf16.msra.mxu0 0
  %178 = vmatprep.subr.bf16.mxu0 0
  %179 = vmatpush2.bf16.msra.mxu0 0
  %180 = vmatprep.subr.bf16.mxu0 0
  %181 = vmatpush2.bf16.msra.mxu0 0
  %182 = vmatprep.subr.bf16.mxu0 0
  %183 = vmatpush2.bf16.msra.mxu0 0
  %184 = vmatprep.subr.bf16.mxu0 0
  %185 = vmatpush2.bf16.msra.mxu0 0
  %186 = vmatprep.subr.bf16.mxu0 0
  %187 = vmatpush2.bf16.msra.mxu0 0
  %188 = vmatprep.subr.bf16.mxu0 0
  %189 = vmatpush2.bf16.msra.mxu0 0
  %190 = vmatprep.subr.bf16.mxu0 0
  %191 = vmatpush2.bf16.msra.mxu0 0
  %192 = vmatprep.mubr.bf16.mxu0 0
  %193 = vmatmul.mubr.bf16.gmra.mxu0 %v96
  %v194 = vpop.f32.mrf.mxu0
  %v195 = vadd.f32 %v62, %v194
  %v196 = vpop.f32.mrf.mxu0
  %v197 = vpop.f32.mrf.mxu0
  %v198 = vadd.f32 %v62, %v197
  %v199 = vpop.f32.mrf.mxu0
  %200 = vmatprep.mubr.bf16.mxu0 0
  %201 = vmatmul.mubr.bf16.gmra.mxu0 %v97
  %v202 = vpop.f32.mrf.mxu0
  %v203 = vadd.f32 %v62, %v202
  %v204 = vpop.f32.mrf.mxu0
  %v205 = vpop.f32.mrf.mxu0
  %v206 = vadd.f32 %v62, %v205
  %v207 = vpop.f32.mrf.mxu0
  %208 = vmatprep.mubr.bf16.mxu0 0
  %209 = vmatmul.mubr.bf16.gmra.mxu0 %v98
  %v210 = vpop.f32.mrf.mxu0
  %v211 = vadd.f32 %v62, %v210
  %v212 = vpop.f32.mrf.mxu0
  %v213 = vpop.f32.mrf.mxu0
  %v214 = vadd.f32 %v62, %v213
  %v215 = vpop.f32.mrf.mxu0
  %216 = vmatprep.mubr.bf16.mxu0 0
  %217 = vmatmul.mubr.bf16.gmra.mxu0 %v99
  %v218 = vpop.f32.mrf.mxu0
  %v219 = vadd.f32 %v62, %v218
  %v220 = vpop.f32.mrf.mxu0
  %v221 = vpop.f32.mrf.mxu0
  %v222 = vadd.f32 %v62, %v221
  %v223 = vpop.f32.mrf.mxu0
  %224 = vmatprep.mubr.bf16.mxu0 0
  %225 = vmatmul.mubr.bf16.gmra.mxu0 %v100
  %v226 = vpop.f32.mrf.mxu0
  %v227 = vadd.f32 %v62, %v226
  %v228 = vpop.f32.mrf.mxu0
  %v229 = vpop.f32.mrf.mxu0
  %v230 = vadd.f32 %v62, %v229
  %v231 = vpop.f32.mrf.mxu0
  %232 = vmatprep.mubr.bf16.mxu0 0
  %233 = vmatmul.mubr.bf16.gmra.mxu0 %v101
  %v234 = vpop.f32.mrf.mxu0
  %v235 = vadd.f32 %v62, %v234
  %v236 = vpop.f32.mrf.mxu0
  %v237 = vpop.f32.mrf.mxu0
  %v238 = vadd.f32 %v62, %v237
  %v239 = vpop.f32.mrf.mxu0
  %240 = vmatprep.mubr.bf16.mxu0 0
  %241 = vmatmul.mubr.bf16.gmra.mxu0 %v102
  %v242 = vpop.f32.mrf.mxu0
  %v243 = vadd.f32 %v62, %v242
  %v244 = vpop.f32.mrf.mxu0
  %v245 = vpop.f32.mrf.mxu0
  %v246 = vadd.f32 %v62, %v245
  %v247 = vpop.f32.mrf.mxu0
  %248 = vmatprep.mubr.bf16.mxu0 0
  %249 = vmatmul.mubr.bf16.gmra.mxu0 %v103
  %v250 = vpop.f32.mrf.mxu0
  %v251 = vadd.f32 %v62, %v250
  %v252 = vpop.f32.mrf.mxu0
  %v253 = vpop.f32.mrf.mxu0
  %v254 = vadd.f32 %v62, %v253
  %v255 = vpop.f32.mrf.mxu0
  %256 = vdwg.mxu0
  %v257 = vmax.f32 %v195, 0.0
  %v258 = vmax.f32 %v198, 0.0
  %v259 = vmax.f32 %v203, 0.0
  %v260 = vmax.f32 %v206, 0.0
  %v261 = vmax.f32 %v211, 0.0
  %v262 = vmax.f32 %v214, 0.0
  %v263 = vmax.f32 %v219, 0.0
  %v264 = vmax.f32 %v222, 0.0
  %v265 = vmax.f32 %v227, 0.0
  %v266 = vmax.f32 %v230, 0.0
  %v267 = vmax.f32 %v235, 0.0
  %v268 = vmax.f32 %v238, 0.0
  %v269 = vmax.f32 %v243, 0.0
  %v270 = vmax.f32 %v246, 0.0
  %v271 = vmax.f32 %v251, 0.0
  %v272 = vmax.f32 %v254, 0.0
  %273 = vst [vmem:[%s4] sm:$0xff] %v257
  %274 = vst [vmem:[%s4 + $0x8] sm:$0xff] %v258
  %275 = vst [vmem:[%s4 + $0x10] sm:$0xff] %v259
  %276 = vst [vmem:[%s4 + $0x18] sm:$0xff] %v260
  %277 = vst [vmem:[%s4 + $0x20] sm:$0xff] %v261
  %278 = vst [vmem:[%s4 + $0x28] sm:$0xff] %v262
  %279 = vst [vmem:[%s4 + $0x30] sm:$0xff] %v263
  %280 = vst [vmem:[%s4 + $0x38] sm:$0xff] %v264
  %281 = vst [vmem:[%s4 + $0x40] sm:$0xff] %v265
  %282 = vst [vmem:[%s4 + $0x48] sm:$0xff] %v266
  %283 = vst [vmem:[%s4 + $0x50] sm:$0xff] %v267
  %284 = vst [vmem:[%s4 + $0x58] sm:$0xff] %v268
  %285 = vst [vmem:[%s4 + $0x60] sm:$0xff] %v269
  %286 = vst [vmem:[%s4 + $0x68] sm:$0xff] %v270
  %287 = vst [vmem:[%s4 + $0x70] sm:$0xff] %v271
  %288 = vst [vmem:[%s4 + $0x78] sm:$0xff] %v272
  %v289 = vlaneseq
  %v290 = vshrl.u32 %v289, 7
  %v291 = vld [vmem:[%s0] sm:$0x1]
  %v292 = vlaneseq
  %v293 = vshrl.u32 %v292, 7
  %v294 = vsub.s32 0, %v293
  %v295 = vrot.slane %v291, %v294
  %vm296 = vcmp.eq.s32.totalorder %v295, %v290
  %v297 = vsel %vm296, 1, 0
  %v298 = vcvt.s32.f32 %v297
  %v299 = vpack.c.bf16 %v298, %v298
  %v300 = vld [vmem:[%s5] sm:$0xff]
  %v301 = vpack.c.bf16 %v258, %v257
  %v302 = vpack.c.bf16 %v260, %v259
  %v303 = vpack.c.bf16 %v262, %v261
  %v304 = vpack.c.bf16 %v264, %v263
  %v305 = vpack.c.bf16 %v266, %v265
  %v306 = vpack.c.bf16 %v268, %v267
  %v307 = vpack.c.bf16 %v270, %v269
  %v308 = vpack.c.bf16 %v272, %v271
  %309 = vmatprep.subr.bf16.mxu0 0
  %310 = vmatpush1.bf16.msra.mxu0 %v308
  %311 = vmatprep.subr.bf16.mxu0 0
  %312 = vmatpush1.bf16.msra.mxu0 %v307
  %313 = vmatprep.subr.bf16.mxu0 0
  %314 = vmatpush1.bf16.msra.mxu0 %v306
  %315 = vmatprep.subr.bf16.mxu0 0
  %316 = vmatpush1.bf16.msra.mxu0 %v305
  %317 = vmatprep.subr.bf16.mxu0 0
  %318 = vmatpush1.bf16.msra.mxu0 %v304
  %319 = vmatprep.subr.bf16.mxu0 0
  %320 = vmatpush1.bf16.msra.mxu0 %v303
  %321 = vmatprep.subr.bf16.mxu0 0
  %322 = vmatpush1.bf16.msra.mxu0 %v302
  %323 = vmatprep.subr.bf16.mxu0 0
  %324 = vmatpush1.bf16.msra.mxu0 %v301
  %325 = vmatprep.subr.bf16.mxu0 0
  %326 = vmatpush2.bf16.msra.mxu0 0
  %327 = vmatprep.subr.bf16.mxu0 0
  %328 = vmatpush2.bf16.msra.mxu0 0
  %329 = vmatprep.subr.bf16.mxu0 0
  %330 = vmatpush2.bf16.msra.mxu0 0
  %331 = vmatprep.subr.bf16.mxu0 0
  %332 = vmatpush2.bf16.msra.mxu0 0
  %333 = vmatprep.subr.bf16.mxu0 0
  %334 = vmatpush2.bf16.msra.mxu0 0
  %335 = vmatprep.subr.bf16.mxu0 0
  %336 = vmatpush2.bf16.msra.mxu0 0
  %337 = vmatprep.subr.bf16.mxu0 0
  %338 = vmatpush2.bf16.msra.mxu0 0
  %339 = vmatprep.subr.bf16.mxu0 0
  %340 = vmatpush2.bf16.msra.mxu0 0
  %341 = vmatprep.mubr.bf16.mxu0 0
  %342 = vmatmul.mubr.bf16.gmra.mxu0 %v299
  %v343 = vpop.f32.mrf.mxu0
  %v344 = vadd.f32 0.0, %v343
  %v345 = vpop.f32.mrf.mxu0
  %v346 = vpop.f32.mrf.mxu0
  %v347 = vpop.f32.mrf.mxu0
  %348 = vdwg.mxu0
  %v349 = vadd.f32 %v300, %v344
  %350 = vst [vmem:[%s5] sm:$0xff] %v349
  // Predicated region
  $region22: #{ginfominmax_forward.2} parent=0 // pred_check
    _
  $region23: #{ginfominmax_forward.2} parent=0 // pred_check_branch
    %352 = sbr.rel (0) target = $region25
  $region24: #{ginfominmax_forward.2} parent=0 // pred_region
    _
  $region25: #{ginfominmax_forward.2} parent=0 // pred_fallthru
    _
  // Predicated region
  $region26: #{ginfominmax_forward.2} parent=0 // pred_check
    _
  $region27: #{ginfominmax_forward.2} parent=0 // pred_check_branch
    %354 = sbr.rel (0) target = $region29
  $region28: #{ginfominmax_forward.2} parent=0 // pred_region
    _
  $region29: #{ginfominmax_forward.2} parent=0 // pred_fallthru
    _
  // Predicated region
  $region30: #{ginfominmax_forward.2} parent=0 // pred_check
    _
  $region31: #{ginfominmax_forward.2} parent=0 // pred_check_branch
    %356 = sbr.rel (0) target = $region33
  $region32: #{ginfominmax_forward.2} parent=0 // pred_region
    _
  $region33: #{ginfominmax_forward.2} parent=0 // pred_fallthru
    _
  // Predicated region
  $region34: #{ginfominmax_forward.2} parent=0 // pred_check
    _
  $region35: #{ginfominmax_forward.2} parent=0 // pred_check_branch
    %358 = sbr.rel (0) target = $region37
  $region36: #{ginfominmax_forward.2} parent=0 // pred_region
    _
  $region37: #{ginfominmax_forward.2} parent=0 // pred_fallthru
    _

</llo_original>
